<compile_context>
chip_gen: v7x
topology: tpu7x:2x2x1
jax: 0.10.0
libtpu: 0.0.40
codegen_flags: <defaults>
</compile_context>

<pallas_src>
import math

import jax
import jax.numpy as jnp
from jax import lax
from jax.experimental import pallas as pl
from jax.experimental.pallas import tpu as pltpu

INPUT_DIM = 500
CLASS_NUM = 79
H1, H2, H3 = 128, 256, 128
DROP_P = 0.5
SCALE = 1.0 / (1.0 - DROP_P)

OUT_PAD = 128        # 79 -> 128: lane-dense output stores / clean MXU N
TB_MAX = 512         # max batch rows per grid step


def _choose_tb(batch):
    """Pick the batch tile: big (amortize ~0.35us/step overhead), sublane (8)
    aligned, and with an even tile count when >1 tile so v7x's two
    TensorCores both get work from the 'parallel' grid axis."""
    b8 = -(-batch // 8) * 8
    if b8 <= TB_MAX:
        return b8                       # single tile covers the whole batch
    n = -(-b8 // TB_MAX)
    if n % 2:
        n += 1                          # even tile count for 2-TC sharding
    tb = -(-b8 // n)
    return -(-tb // 8) * 8


def mlp_kernel(seed_ref,                       # scalar prefetch (SMEM)
               x_ref, w1_ref, b1_ref, w2_ref, b2_ref,
               w3_ref, b3_ref, w4_ref, b4_ref,
               out_ref):
    pid = pl.program_id(0).astype(jnp.uint32)
    seed = seed_ref[0].astype(jnp.uint32)
    tb = x_ref.shape[0]

    # ---- one shared dropout hash per tile: (TB, 256), one bit per layer ----
    r = lax.broadcasted_iota(jnp.int32, (tb, H2), 0).astype(jnp.uint32)
    c = lax.broadcasted_iota(jnp.int32, (tb, H2), 1).astype(jnp.uint32)
    ctr = ((r << jnp.uint32(16)) + r + c
           + seed * jnp.uint32(0x9E3779B9)
           + pid * jnp.uint32(0x85EBCA6B))
    bits = ctr ^ (ctr >> jnp.uint32(16))
    bits = bits * jnp.uint32(0x7FEB352D)          # single mix multiply
    bits = bits ^ (bits >> jnp.uint32(15))

    keep1 = (bits[:, :H1] & jnp.uint32(1)) != 0   # distinct bit per layer
    keep2 = (bits & jnp.uint32(2)) != 0
    keep3 = (bits[:, :H3] & jnp.uint32(4)) != 0

    def dropout_relu(h_f32, keep):
        # relu(dropout(h)) with p=0.5:  keep ? max(h,0)*2 : 0  (done in bf16,
        # since the result feeds a bf16 matmul anyway).
        h = h_f32.astype(jnp.bfloat16)
        return jnp.where(keep, jnp.maximum(h, 0.0) * SCALE, 0.0)

    x = x_ref[...].astype(jnp.bfloat16)            # (TB, 500) cast in-kernel

    z1 = dropout_relu(
        jnp.dot(x, w1_ref[...], preferred_element_type=jnp.float32)
        + b1_ref[...], keep1)
    z2 = dropout_relu(
        jnp.dot(z1, w2_ref[...], preferred_element_type=jnp.float32)
        + b2_ref[...], keep2)
    z3 = dropout_relu(
        jnp.dot(z2, w3_ref[...], preferred_element_type=jnp.float32)
        + b3_ref[...], keep3)
    out = (jnp.dot(z3, w4_ref[...], preferred_element_type=jnp.float32)
           + b4_ref[...])
    out_ref[...] = out.astype(out_ref.dtype)


def prepare_params(params):
    """One-time pad/cast of the weights (hoisted out of the forward path)."""
    w1, b1, w2, b2, w3, b3, w4, b4 = params
    w4_p = jnp.pad(w4, ((0, 0), (0, OUT_PAD - CLASS_NUM)))
    b4_p = jnp.pad(b4, ((0, 0), (0, OUT_PAD - CLASS_NUM)))
    return (w1.astype(jnp.bfloat16), b1,
            w2.astype(jnp.bfloat16), b2,
            w3.astype(jnp.bfloat16), b3,
            w4_p.astype(jnp.bfloat16), b4_p)


def mlp_forward(x, prepared_params, seed):
    """x: (B, INPUT_DIM) f32.  prepared_params: output of prepare_params."""
    w1, b1, w2, b2, w3, b3, w4, b4 = prepared_params
    B, D = x.shape
    assert D == INPUT_DIM

    TB = _choose_tb(B)
    n_tiles = pl.cdiv(B, TB)
    seed_arr = jnp.asarray([seed], dtype=jnp.int32)

    # Weights/biases: same block every step -> resident across the batch grid.
    weight_specs = [
        pl.BlockSpec((INPUT_DIM, H1), lambda i, s: (0, 0)),
        pl.BlockSpec((1, H1),         lambda i, s: (0, 0)),
        pl.BlockSpec((H1, H2),        lambda i, s: (0, 0)),
        pl.BlockSpec((1, H2),         lambda i, s: (0, 0)),
        pl.BlockSpec((H2, H3),        lambda i, s: (0, 0)),
        pl.BlockSpec((1, H3),         lambda i, s: (0, 0)),
        pl.BlockSpec((H3, OUT_PAD),   lambda i, s: (0, 0)),
        pl.BlockSpec((1, OUT_PAD),    lambda i, s: (0, 0)),
    ]
    # TODO(synk): weight specs could use pipeline_mode=pl.Buffered(1) to drop
    # their (idle) second buffer; skipped as the VMEM saving is negligible here.

    out_padded = pl.pallas_call(
        mlp_kernel,
        out_shape=jax.ShapeDtypeStruct((B, OUT_PAD), jnp.float32),
        grid_spec=pltpu.PrefetchScalarGridSpec(
            num_scalar_prefetch=1,
            grid=(n_tiles,),
            in_specs=[pl.BlockSpec((TB, INPUT_DIM), lambda i, s: (i, 0))]
                     + weight_specs,
            out_specs=pl.BlockSpec((TB, OUT_PAD), lambda i, s: (i, 0)),
        ),
        compiler_params=pltpu.CompilerParams(
            dimension_semantics=("parallel",)),   # megacore sharding on v7x
    )(seed_arr, x, w1, b1, w2, b2, w3, b3, w4, b4)

    return out_padded[:, :CLASS_NUM]


def xavier_normal(key, fan_in, fan_out):
    std = math.sqrt(2.0 / (fan_in + fan_out))
    return jax.random.normal(key, (fan_in, fan_out), dtype=jnp.float32) * std


def init_params(key):
    k1, k2, k3, k4 = jax.random.split(key, 4)
    dims = [(INPUT_DIM, H1), (H1, H2), (H2, H3), (H3, CLASS_NUM)]
    params = []
    for k, (fi, fo) in zip([k1, k2, k3, k4], dims):
        w = xavier_normal(k, fi, fo)               # stored pre-transposed (in, out)
        b = jnp.zeros((1, fo), dtype=jnp.float32)  # constant 0.0 init
        params.extend([w, b])
    return tuple(params)


if __name__ == "__main__":
    key = jax.random.PRNGKey(0)
    pkey, xkey = jax.random.split(key)

    params = prepare_params(init_params(pkey))

    batch = 8
    x = jax.random.normal(xkey, (batch, INPUT_DIM), dtype=jnp.float32)

    out = mlp_forward(x, params, seed=1234)
    jax.block_until_ready(out)

    assert out.shape == (batch, CLASS_NUM), out.shape
    assert out.dtype == jnp.float32
    assert bool(jnp.all(jnp.isfinite(out)))
    print("KERNEL_OK")
</pallas_src>

<mosaic_0001>
module attributes {stable_mosaic.version = 11 : i64} {
  func.func @mlp_kernel(%arg0: i32, %arg1: memref<1xi32, #tpu.memory_space<smem>>, %arg2: memref<8x500xf32, #tpu.memory_space<vmem>>, %arg3: memref<500x128xbf16, #tpu.memory_space<vmem>>, %arg4: memref<1x128xf32, #tpu.memory_space<vmem>>, %arg5: memref<128x256xbf16, #tpu.memory_space<vmem>>, %arg6: memref<1x256xf32, #tpu.memory_space<vmem>>, %arg7: memref<256x128xbf16, #tpu.memory_space<vmem>>, %arg8: memref<1x128xf32, #tpu.memory_space<vmem>>, %arg9: memref<128x128xbf16, #tpu.memory_space<vmem>>, %arg10: memref<1x128xf32, #tpu.memory_space<vmem>>, %arg11: memref<8x128xf32, #tpu.memory_space<vmem>>) attributes {dimension_semantics = [#tpu.dimension_semantics<parallel>], iteration_bounds = array<i64: 1>, scalar_prefetch = 1 : i64, scratch_operands = 0 : i64, tpu.core_type = #tpu.core_type<tc>, window_params = [{transform_indices = @transform_0, window_bounds = array<i64: 8, 500>}, {pipeline_mode = #tpu.pipeline_mode<synchronous>, transform_indices = @transform_1, window_bounds = array<i64: 500, 128>}, {pipeline_mode = #tpu.pipeline_mode<synchronous>, transform_indices = @transform_2, window_bounds = array<i64: 1, 128>}, {pipeline_mode = #tpu.pipeline_mode<synchronous>, transform_indices = @transform_3, window_bounds = array<i64: 128, 256>}, {pipeline_mode = #tpu.pipeline_mode<synchronous>, transform_indices = @transform_4, window_bounds = array<i64: 1, 256>}, {pipeline_mode = #tpu.pipeline_mode<synchronous>, transform_indices = @transform_5, window_bounds = array<i64: 256, 128>}, {pipeline_mode = #tpu.pipeline_mode<synchronous>, transform_indices = @transform_6, window_bounds = array<i64: 1, 128>}, {pipeline_mode = #tpu.pipeline_mode<synchronous>, transform_indices = @transform_7, window_bounds = array<i64: 128, 128>}, {pipeline_mode = #tpu.pipeline_mode<synchronous>, transform_indices = @transform_8, window_bounds = array<i64: 1, 128>}, {transform_indices = @transform_9, window_bounds = array<i64: 8, 128>}]} {
    %c0 = arith.constant 0 : index
    %0 = memref.load %arg1[%c0] : memref<1xi32, #tpu.memory_space<smem>>
    %1 = tpu.iota {dimensions = array<i32: 0>} : vector<8x256xi32>
    %2 = tpu.iota {dimensions = array<i32: 1>} : vector<8x256xi32>
    %c16_i32 = arith.constant 16 : i32
    %3 = vector.broadcast %c16_i32 : i32 to vector<8x256xi32>
    %4 = arith.shli %1, %3 : vector<8x256xi32>
    %5 = arith.addi %4, %1 : vector<8x256xi32>
    %6 = arith.addi %5, %2 : vector<8x256xi32>
    %c-1640531527_i32 = arith.constant -1640531527 : i32
    %7 = arith.muli %0, %c-1640531527_i32 : i32
    %8 = vector.broadcast %7 : i32 to vector<8x256xi32>
    %9 = arith.addi %6, %8 : vector<8x256xi32>
    %c-2048144789_i32 = arith.constant -2048144789 : i32
    %10 = arith.muli %arg0, %c-2048144789_i32 : i32
    %11 = vector.broadcast %10 : i32 to vector<8x256xi32>
    %12 = arith.addi %9, %11 : vector<8x256xi32>
    %c16_i32_0 = arith.constant 16 : i32
    %13 = vector.broadcast %c16_i32_0 : i32 to vector<8x256xi32>
    %14 = arith.shrui %12, %13 : vector<8x256xi32>
    %15 = arith.xori %12, %14 : vector<8x256xi32>
    %c2146121005_i32 = arith.constant 2146121005 : i32
    %16 = vector.broadcast %c2146121005_i32 : i32 to vector<8x256xi32>
    %17 = arith.muli %15, %16 : vector<8x256xi32>
    %c15_i32 = arith.constant 15 : i32
    %18 = vector.broadcast %c15_i32 : i32 to vector<8x256xi32>
    %19 = arith.shrui %17, %18 : vector<8x256xi32>
    %20 = arith.xori %17, %19 : vector<8x256xi32>
    %21 = vector.extract_strided_slice %20 {offsets = [0, 0], sizes = [8, 128], strides = [1, 1]} : vector<8x256xi32> to vector<8x128xi32>
    %c1_i32 = arith.constant 1 : i32
    %22 = vector.broadcast %c1_i32 : i32 to vector<8x128xi32>
    %23 = arith.andi %21, %22 : vector<8x128xi32>
    %c0_i32 = arith.constant 0 : i32
    %24 = vector.broadcast %c0_i32 : i32 to vector<8x128xi32>
    %25 = arith.cmpi ne, %23, %24 : vector<8x128xi32>
    %c2_i32 = arith.constant 2 : i32
    %26 = vector.broadcast %c2_i32 : i32 to vector<8x256xi32>
    %27 = arith.andi %20, %26 : vector<8x256xi32>
    %c0_i32_1 = arith.constant 0 : i32
    %28 = vector.broadcast %c0_i32_1 : i32 to vector<8x256xi32>
    %29 = arith.cmpi ne, %27, %28 : vector<8x256xi32>
    %30 = vector.extract_strided_slice %20 {offsets = [0, 0], sizes = [8, 128], strides = [1, 1]} : vector<8x256xi32> to vector<8x128xi32>
    %c4_i32 = arith.constant 4 : i32
    %31 = vector.broadcast %c4_i32 : i32 to vector<8x128xi32>
    %32 = arith.andi %30, %31 : vector<8x128xi32>
    %c0_i32_2 = arith.constant 0 : i32
    %33 = vector.broadcast %c0_i32_2 : i32 to vector<8x128xi32>
    %34 = arith.cmpi ne, %32, %33 : vector<8x128xi32>
    %c0_3 = arith.constant 0 : index
    %c0_4 = arith.constant 0 : index
    %35 = vector.load %arg2[%c0_3, %c0_4] : memref<8x500xf32, #tpu.memory_space<vmem>>, vector<8x500xf32>
    %36 = arith.truncf %35 : vector<8x500xf32> to vector<8x500xbf16>
    %c0_5 = arith.constant 0 : index
    %c0_6 = arith.constant 0 : index
    %37 = vector.load %arg3[%c0_5, %c0_6] : memref<500x128xbf16, #tpu.memory_space<vmem>>, vector<500x128xbf16>
    %cst = arith.constant dense<0.000000e+00> : vector<8x128xf32>
    %38 = tpu.matmul %36, %37, %cst {dimension_numbers = #tpu.dot_dimension_numbers<[1], [0], [0], [1], [0, 0, 1, 1], [], []>} : vector<8x500xbf16>, vector<500x128xbf16>, vector<8x128xf32> -> vector<8x128xf32>
    %c0_7 = arith.constant 0 : index
    %c0_8 = arith.constant 0 : index
    %39 = vector.load %arg4[%c0_7, %c0_8] : memref<1x128xf32, #tpu.memory_space<vmem>>, vector<1x128xf32>
    %40 = vector.broadcast %39 : vector<1x128xf32> to vector<8x128xf32>
    %41 = arith.addf %38, %40 : vector<8x128xf32>
    %42 = arith.truncf %41 : vector<8x128xf32> to vector<8x128xbf16>
    %cst_9 = arith.constant 0.000000e+00 : bf16
    %43 = vector.broadcast %cst_9 : bf16 to vector<8x128xbf16>
    %44 = arith.maximumf %42, %43 : vector<8x128xbf16>
    %cst_10 = arith.constant 2.000000e+00 : bf16
    %45 = vector.broadcast %cst_10 : bf16 to vector<8x128xbf16>
    %46 = arith.mulf %44, %45 : vector<8x128xbf16>
    %cst_11 = arith.constant 0.000000e+00 : f32
    %47 = arith.truncf %cst_11 : f32 to bf16
    %48 = vector.broadcast %47 : bf16 to vector<8x128xbf16>
    %49 = arith.select %25, %46, %48 : vector<8x128xi1>, vector<8x128xbf16>
    %c0_12 = arith.constant 0 : index
    %c0_13 = arith.constant 0 : index
    %50 = vector.load %arg5[%c0_12, %c0_13] : memref<128x256xbf16, #tpu.memory_space<vmem>>, vector<128x256xbf16>
    %cst_14 = arith.constant dense<0.000000e+00> : vector<8x256xf32>
    %51 = tpu.matmul %49, %50, %cst_14 {dimension_numbers = #tpu.dot_dimension_numbers<[1], [0], [0], [1], [0, 0, 1, 1], [], []>} : vector<8x128xbf16>, vector<128x256xbf16>, vector<8x256xf32> -> vector<8x256xf32>
    %c0_15 = arith.constant 0 : index
    %c0_16 = arith.constant 0 : index
    %52 = vector.load %arg6[%c0_15, %c0_16] : memref<1x256xf32, #tpu.memory_space<vmem>>, vector<1x256xf32>
    %53 = vector.broadcast %52 : vector<1x256xf32> to vector<8x256xf32>
    %54 = arith.addf %51, %53 : vector<8x256xf32>
    %55 = arith.truncf %54 : vector<8x256xf32> to vector<8x256xbf16>
    %cst_17 = arith.constant 0.000000e+00 : bf16
    %56 = vector.broadcast %cst_17 : bf16 to vector<8x256xbf16>
    %57 = arith.maximumf %55, %56 : vector<8x256xbf16>
    %cst_18 = arith.constant 2.000000e+00 : bf16
    %58 = vector.broadcast %cst_18 : bf16 to vector<8x256xbf16>
    %59 = arith.mulf %57, %58 : vector<8x256xbf16>
    %cst_19 = arith.constant 0.000000e+00 : f32
    %60 = arith.truncf %cst_19 : f32 to bf16
    %61 = vector.broadcast %60 : bf16 to vector<8x256xbf16>
    %62 = arith.select %29, %59, %61 : vector<8x256xi1>, vector<8x256xbf16>
    %c0_20 = arith.constant 0 : index
    %c0_21 = arith.constant 0 : index
    %63 = vector.load %arg7[%c0_20, %c0_21] : memref<256x128xbf16, #tpu.memory_space<vmem>>, vector<256x128xbf16>
    %cst_22 = arith.constant dense<0.000000e+00> : vector<8x128xf32>
    %64 = tpu.matmul %62, %63, %cst_22 {dimension_numbers = #tpu.dot_dimension_numbers<[1], [0], [0], [1], [0, 0, 1, 1], [], []>} : vector<8x256xbf16>, vector<256x128xbf16>, vector<8x128xf32> -> vector<8x128xf32>
    %c0_23 = arith.constant 0 : index
    %c0_24 = arith.constant 0 : index
    %65 = vector.load %arg8[%c0_23, %c0_24] : memref<1x128xf32, #tpu.memory_space<vmem>>, vector<1x128xf32>
    %66 = vector.broadcast %65 : vector<1x128xf32> to vector<8x128xf32>
    %67 = arith.addf %64, %66 : vector<8x128xf32>
    %68 = arith.truncf %67 : vector<8x128xf32> to vector<8x128xbf16>
    %cst_25 = arith.constant 0.000000e+00 : bf16
    %69 = vector.broadcast %cst_25 : bf16 to vector<8x128xbf16>
    %70 = arith.maximumf %68, %69 : vector<8x128xbf16>
    %cst_26 = arith.constant 2.000000e+00 : bf16
    %71 = vector.broadcast %cst_26 : bf16 to vector<8x128xbf16>
    %72 = arith.mulf %70, %71 : vector<8x128xbf16>
    %cst_27 = arith.constant 0.000000e+00 : f32
    %73 = arith.truncf %cst_27 : f32 to bf16
    %74 = vector.broadcast %73 : bf16 to vector<8x128xbf16>
    %75 = arith.select %34, %72, %74 : vector<8x128xi1>, vector<8x128xbf16>
    %c0_28 = arith.constant 0 : index
    %c0_29 = arith.constant 0 : index
    %76 = vector.load %arg9[%c0_28, %c0_29] : memref<128x128xbf16, #tpu.memory_space<vmem>>, vector<128x128xbf16>
    %cst_30 = arith.constant dense<0.000000e+00> : vector<8x128xf32>
    %77 = tpu.matmul %75, %76, %cst_30 {dimension_numbers = #tpu.dot_dimension_numbers<[1], [0], [0], [1], [0, 0, 1, 1], [], []>} : vector<8x128xbf16>, vector<128x128xbf16>, vector<8x128xf32> -> vector<8x128xf32>
    %c0_31 = arith.constant 0 : index
    %c0_32 = arith.constant 0 : index
    %78 = vector.load %arg10[%c0_31, %c0_32] : memref<1x128xf32, #tpu.memory_space<vmem>>, vector<1x128xf32>
    %79 = vector.broadcast %78 : vector<1x128xf32> to vector<8x128xf32>
    %80 = arith.addf %77, %79 : vector<8x128xf32>
    %c0_33 = arith.constant 0 : index
    %c0_34 = arith.constant 0 : index
    %81 = vector.load %arg11[%c0_33, %c0_34] : memref<8x128xf32, #tpu.memory_space<vmem>>, vector<8x128xf32>
    tpu.vector_store %arg11[%c0_33, %c0_34], %80 {strides = array<i32>} : memref<8x128xf32, #tpu.memory_space<vmem>>, vector<8x128xf32>,
    return
  }
  func.func @transform_0(%arg0: i32, %arg1: memref<1xi32, #tpu.memory_space<smem>>) -> (i32, i32) {
    %c0_i32 = arith.constant 0 : i32
    %c0_i32_0 = arith.constant 0 : i32
    return %arg0, %c0_i32 : i32, i32
  }
  func.func @transform_1(%arg0: i32, %arg1: memref<1xi32, #tpu.memory_space<smem>>) -> (i32, i32) {
    %c0_i32 = arith.constant 0 : i32
    %c0_i32_0 = arith.constant 0 : i32
    %c0_i32_1 = arith.constant 0 : i32
    return %c0_i32, %c0_i32_0 : i32, i32
  }
  func.func @transform_2(%arg0: i32, %arg1: memref<1xi32, #tpu.memory_space<smem>>) -> (i32, i32) {
    %c0_i32 = arith.constant 0 : i32
    %c0_i32_0 = arith.constant 0 : i32
    %c0_i32_1 = arith.constant 0 : i32
    return %c0_i32, %c0_i32_0 : i32, i32
  }
  func.func @transform_3(%arg0: i32, %arg1: memref<1xi32, #tpu.memory_space<smem>>) -> (i32, i32) {
    %c0_i32 = arith.constant 0 : i32
    %c0_i32_0 = arith.constant 0 : i32
    %c0_i32_1 = arith.constant 0 : i32
    return %c0_i32, %c0_i32_0 : i32, i32
  }
  func.func @transform_4(%arg0: i32, %arg1: memref<1xi32, #tpu.memory_space<smem>>) -> (i32, i32) {
    %c0_i32 = arith.constant 0 : i32
    %c0_i32_0 = arith.constant 0 : i32
    %c0_i32_1 = arith.constant 0 : i32
    return %c0_i32, %c0_i32_0 : i32, i32
  }
  func.func @transform_5(%arg0: i32, %arg1: memref<1xi32, #tpu.memory_space<smem>>) -> (i32, i32) {
    %c0_i32 = arith.constant 0 : i32
    %c0_i32_0 = arith.constant 0 : i32
    %c0_i32_1 = arith.constant 0 : i32
    return %c0_i32, %c0_i32_0 : i32, i32
  }
  func.func @transform_6(%arg0: i32, %arg1: memref<1xi32, #tpu.memory_space<smem>>) -> (i32, i32) {
    %c0_i32 = arith.constant 0 : i32
    %c0_i32_0 = arith.constant 0 : i32
    %c0_i32_1 = arith.constant 0 : i32
    return %c0_i32, %c0_i32_0 : i32, i32
  }
  func.func @transform_7(%arg0: i32, %arg1: memref<1xi32, #tpu.memory_space<smem>>) -> (i32, i32) {
    %c0_i32 = arith.constant 0 : i32
    %c0_i32_0 = arith.constant 0 : i32
    %c0_i32_1 = arith.constant 0 : i32
    return %c0_i32, %c0_i32_0 : i32, i32
  }
  func.func @transform_8(%arg0: i32, %arg1: memref<1xi32, #tpu.memory_space<smem>>) -> (i32, i32) {
    %c0_i32 = arith.constant 0 : i32
    %c0_i32_0 = arith.constant 0 : i32
    %c0_i32_1 = arith.constant 0 : i32
    return %c0_i32, %c0_i32_0 : i32, i32
  }
  func.func @transform_9(%arg0: i32, %arg1: memref<1xi32, #tpu.memory_space<smem>>) -> (i32, i32) {
    %c0_i32 = arith.constant 0 : i32
    %c0_i32_0 = arith.constant 0 : i32
    return %arg0, %c0_i32 : i32, i32
  }
}

</mosaic_0001>

<llo_original>
// kernel: tpu_custom_call.1
$region0: #{tpu_custom_call.1}
  #allocation0 [shape = 'u32[]', space=smem, size = 0x4, offset = 0x4, fixed_abs, tag = 'smem constant byte address 0x4 - core index']
  #allocation1 [shape = 'u32[144,128]{1,0:T(1,128)}', space=vmem, size = 0x12000, scoped, tag = 'internal scratch']
  #allocation2 [shape = 's32[1]{0}', space=sflag, size = 0x4, scoped, tag = 'scoped memory for tpu_custom_call.1']
  #allocation3 [shape = 's32[1]{0:T(128)S(6)}', space=smem, size = 0x200, scoped, tag = 'prefetched SMEM operand 0']
  %s0 = inlined_call_operand.<no memory space> [shape: s32[1], index: 0, kind: input, shape index: {}]
  %s1 = inlined_call_operand.hbm [shape: f32[8,500], index: 1, kind: input, shape index: {}]
  %s2 = inlined_call_operand.hbm [shape: bf16[500,128], index: 2, kind: input, shape index: {}]
  %s3 = inlined_call_operand.vmem [shape: f32[1,128], index: 3, kind: input, shape index: {}]
  %s4 = inlined_call_operand.hbm [shape: bf16[128,256], index: 4, kind: input, shape index: {}]
  %s5 = inlined_call_operand.vmem [shape: f32[1,256], index: 5, kind: input, shape index: {}]
  %s6 = inlined_call_operand.hbm [shape: bf16[256,128], index: 6, kind: input, shape index: {}]
  %s7 = inlined_call_operand.vmem [shape: f32[1,128], index: 7, kind: input, shape index: {}]
  %s8 = inlined_call_operand.hbm [shape: bf16[128,128], index: 8, kind: input, shape index: {}]
  %s9 = inlined_call_operand.vmem [shape: f32[1,128], index: 9, kind: input, shape index: {}]
  %s10 = inlined_call_operand.hbm [shape: f32[8,128], index: 10, kind: output, shape index: {}]
  %s11 = sld [smem:[#allocation0]]
  $region66: #{tpu_custom_call.1} parent=0
    _
  %s13 = ssub.s32 1, %s11
  %s14 = scalar_select 0, %s13, %s11
  %15 = sst [smem:[#allocation3]] %s0
  $region1: #{tpu_custom_call.1} parent=0
    #allocation4 [shape = 'u8[16384]{0}', space=vmem, size = 0x4000, scoped, tag = 'input window, operand 1, single buffered']
    #allocation5 [shape = 's32[1]{0}', space=sflag, size = 0x4, scoped, tag = 'scoped memory for tpu_custom_call.1']
    #allocation6 [shape = 's32[1]{0}', space=sflag, size = 0x4, scoped, tag = 'scoped memory for tpu_custom_call.1']
    #allocation7 [shape = 'u8[129024]{0}', space=vmem, size = 0x1f800, scoped, tag = 'input window, operand 2, single buffered']
    #allocation8 [shape = 's32[1]{0}', space=sflag, size = 0x4, scoped, tag = 'scoped memory for tpu_custom_call.1']
    #allocation9 [shape = 'u8[65536]{0}', space=vmem, size = 0x10000, scoped, tag = 'input window, operand 4, single buffered']
    #allocation10 [shape = 'u8[65536]{0}', space=vmem, size = 0x10000, scoped, tag = 'input window, operand 6, single buffered']
    #allocation11 [shape = 's32[1]{0}', space=sflag, size = 0x4, scoped, tag = 'scoped memory for tpu_custom_call.1']
    #allocation12 [shape = 'u8[32768]{0}', space=vmem, size = 0x8000, scoped, tag = 'input window, operand 8, single buffered']
    #allocation13 [shape = 'u8[4096]{0}', space=vmem, size = 0x1000, scoped, tag = 'output window, operand 0, single buffered']
    %16 = vsyncpa [#allocation5], 0
    %17 = vsyncpa [#allocation8], 0
    %18 = vsyncpa [#allocation11], 0
    %19 = vsyncpa [#allocation6], 0
    // Predicated region
    $region2: #{tpu_custom_call.1} parent=1 // pred_check
      _
    $region3: #{tpu_custom_call.1} parent=1 // pred_check_branch
      %21 = sbr.rel (0) target = $region5
    $region4: #{tpu_custom_call.1} parent=1 // pred_region
      %s23 = ssub.s32 512, 512
      %24 = vsyncadd [#allocation5], %s23
      %s26 = sshll.u32 [#allocation4], 4
      %s27 = int_to_ptr.vmem [resolvable:$true] %s26
      %29 = dma.hbm_to_vmem [thread:$0]  %s1, 512, %s27, [#allocation5]
    $region5: #{tpu_custom_call.1} parent=1 // pred_fallthru
      _
    // Predicated region
    $region6: #{tpu_custom_call.1} parent=1 // pred_check
      _
    $region7: #{tpu_custom_call.1} parent=1 // pred_check_branch
      %31 = sbr.rel (0) target = $region9
    $region8: #{tpu_custom_call.1} parent=1 // pred_region
      %s33 = ssub.s32 4032, 4032
      %34 = vsyncadd [#allocation8], %s33
      %s35 = sshll.u32 [#allocation7], 4
      %s36 = int_to_ptr.vmem [resolvable:$true] %s35
      %41 = dma.hbm_to_vmem [thread:$0]  %s2, 4032, %s36, [#allocation8], 64, 64, 4
    $region9: #{tpu_custom_call.1} parent=1 // pred_fallthru
      _
    // Predicated region
    $region10: #{tpu_custom_call.1} parent=1 // pred_check
      _
    $region11: #{tpu_custom_call.1} parent=1 // pred_check_branch
      %43 = sbr.rel (0) target = $region13
    $region12: #{tpu_custom_call.1} parent=1 // pred_region
      _
    $region13: #{tpu_custom_call.1} parent=1 // pred_fallthru
      _
    // Predicated region
    $region14: #{tpu_custom_call.1} parent=1 // pred_check
      _
    $region15: #{tpu_custom_call.1} parent=1 // pred_check_branch
      %45 = sbr.rel (0) target = $region17
    $region16: #{tpu_custom_call.1} parent=1 // pred_region
      %s47 = ssub.s32 2048, 2048
      %48 = vsyncadd [#allocation8], %s47
      %s49 = sshll.u32 [#allocation9], 4
      %s50 = int_to_ptr.vmem [resolvable:$true] %s49
      %55 = dma.hbm_to_vmem [thread:$0]  %s4, 2048, %s50, [#allocation8], 128, 128, 8
    $region17: #{tpu_custom_call.1} parent=1 // pred_fallthru
      _
    // Predicated region
    $region18: #{tpu_custom_call.1} parent=1 // pred_check
      _
    $region19: #{tpu_custom_call.1} parent=1 // pred_check_branch
      %57 = sbr.rel (0) target = $region21
    $region20: #{tpu_custom_call.1} parent=1 // pred_region
      _
    $region21: #{tpu_custom_call.1} parent=1 // pred_fallthru
      _
    // Predicated region
    $region22: #{tpu_custom_call.1} parent=1 // pred_check
      _
    $region23: #{tpu_custom_call.1} parent=1 // pred_check_branch
      %59 = sbr.rel (0) target = $region25
    $region24: #{tpu_custom_call.1} parent=1 // pred_region
      %s61 = ssub.s32 2048, 2048
      %62 = vsyncadd [#allocation11], %s61
      %s63 = sshll.u32 [#allocation10], 4
      %s64 = int_to_ptr.vmem [resolvable:$true] %s63
      %69 = dma.hbm_to_vmem [thread:$0]  %s6, 2048, %s64, [#allocation11], 64, 64, 4
    $region25: #{tpu_custom_call.1} parent=1 // pred_fallthru
      _
    // Predicated region
    $region26: #{tpu_custom_call.1} parent=1 // pred_check
      _
    $region27: #{tpu_custom_call.1} parent=1 // pred_check_branch
      %71 = sbr.rel (0) target = $region29
    $region28: #{tpu_custom_call.1} parent=1 // pred_region
      _
    $region29: #{tpu_custom_call.1} parent=1 // pred_fallthru
      _
    // Predicated region
    $region30: #{tpu_custom_call.1} parent=1 // pred_check
      _
    $region31: #{tpu_custom_call.1} parent=1 // pred_check_branch
      %73 = sbr.rel (0) target = $region33
    $region32: #{tpu_custom_call.1} parent=1 // pred_region
      %s75 = ssub.s32 1024, 1024
      %76 = vsyncadd [#allocation11], %s75
      %s77 = sshll.u32 [#allocation12], 4
      %s78 = int_to_ptr.vmem [resolvable:$true] %s77
      %83 = dma.hbm_to_vmem [thread:$0]  %s8, 1024, %s78, [#allocation11], 64, 64, 4
    $region33: #{tpu_custom_call.1} parent=1 // pred_fallthru
      _
    // Predicated region
    $region34: #{tpu_custom_call.1} parent=1 // pred_check
      _
    $region35: #{tpu_custom_call.1} parent=1 // pred_check_branch
      %85 = sbr.rel (0) target = $region37
    $region36: #{tpu_custom_call.1} parent=1 // pred_region
      _
    $region37: #{tpu_custom_call.1} parent=1 // pred_fallthru
      _
    // Predicated region
    $region38: #{tpu_custom_call.1} parent=1 // pred_check
      _
    $region39: #{tpu_custom_call.1} parent=1 // pred_check_branch
      %87 = sbr.rel (0) target = $region41
    $region40: #{tpu_custom_call.1} parent=1 // pred_region
      %88 = dma.done [#allocation5], 512
    $region41: #{tpu_custom_call.1} parent=1 // pred_fallthru
      _
    // Predicated region
    $region42: #{tpu_custom_call.1} parent=1 // pred_check
      _
    $region43: #{tpu_custom_call.1} parent=1 // pred_check_branch
      %90 = sbr.rel (0) target = $region45
    $region44: #{tpu_custom_call.1} parent=1 // pred_region
      %91 = dma.done [#allocation8], 4032
    $region45: #{tpu_custom_call.1} parent=1 // pred_fallthru
      _
    // Predicated region
    $region46: #{tpu_custom_call.1} parent=1 // pred_check
      _
    $region47: #{tpu_custom_call.1} parent=1 // pred_check_branch
      %93 = sbr.rel (0) target = $region49
    $region48: #{tpu_custom_call.1} parent=1 // pred_region
      %94 = dma.done [#allocation8], 2048
    $region49: #{tpu_custom_call.1} parent=1 // pred_fallthru
      _
    // Predicated region
    $region50: #{tpu_custom_call.1} parent=1 // pred_check
      _
    $region51: #{tpu_custom_call.1} parent=1 // pred_check_branch
      %96 = sbr.rel (0) target = $region53
    $region52: #{tpu_custom_call.1} parent=1 // pred_region
      %97 = dma.done [#allocation11], 2048
    $region53: #{tpu_custom_call.1} parent=1 // pred_fallthru
      _
    // Predicated region
    $region54: #{tpu_custom_call.1} parent=1 // pred_check
      _
    $region55: #{tpu_custom_call.1} parent=1 // pred_check_branch
      %99 = sbr.rel (0) target = $region57
    $region56: #{tpu_custom_call.1} parent=1 // pred_region
      %100 = dma.done [#allocation11], 1024
    $region57: #{tpu_custom_call.1} parent=1 // pred_fallthru
      _
    %s103 = sld [smem:[#allocation3]]
    %v104 = vlaneseq
    %v105 = vshrl.u32 %v104, 7
    %v106 = vlaneseq
    %v107 = vand.u32 %v106, 127
    %v108 = vadd.s32 %v107, 128
    %v109 = vshll.u32 %v105, 16
    %v110 = vadd.s32 %v109, %v105
    %v111 = vadd.s32 %v110, %v107
    %v112 = vadd.s32 %v110, %v108
    %s113 = smul.u32 %s103, 2654435769
    %v114 = vstv %s113
    %v115 = vadd.s32 %v111, %v114
    %v116 = vadd.s32 %v112, %v114
    %s117 = smul.u32 0, 2246822507
    %v118 = vstv %s117
    %v119 = vadd.s32 %v115, %v118
    %v120 = vadd.s32 %v116, %v118
    %v121 = vshrl.u32 %v119, 16
    %v122 = vshrl.u32 %v120, 16
    %v123 = vxor.u32 %v119, %v121
    %v124 = vxor.u32 %v120, %v122
    %v125 = vmul.u32 %v123, 2146121005
    %v126 = vmul.u32 %v124, 2146121005
    %v127 = vshrl.u32 %v125, 15
    %v128 = vshrl.u32 %v126, 15
    %v129 = vxor.u32 %v125, %v127
    %v130 = vxor.u32 %v126, %v128
    %v131 = vand.u32 %v129, 1
    %vm132 = vcmp.ne.s32.totalorder %v131, 0
    %v133 = vand.u32 %v129, 2
    %v134 = vand.u32 %v130, 2
    %vm135 = vcmp.ne.s32.totalorder %v133, 0
    %vm136 = vcmp.ne.s32.totalorder %v134, 0
    %v137 = vand.u32 %v129, 4
    %vm138 = vcmp.ne.s32.totalorder %v137, 0
    %v139 = vld [vmem:[#allocation4] sm:$0xff]
    %v140 = vld [vmem:[#allocation4 + $0x8] sm:$0xff]
    %v141 = vld [vmem:[#allocation4 + $0x10] sm:$0xff]
    %v142 = vld [vmem:[#allocation4 + $0x18] sm:$0xff]
    %v143 = vpack.c.bf16 %v139, %v139
    %v144 = vpack.c.bf16 %v140, %v140
    %v145 = vpack.c.bf16 %v141, %v141
    %v146 = vpack.c.bf16 %v142, %v142
    %v147 = vld [vmem:[#allocation7] sm:$0xf]
    %v148 = vld [vmem:[#allocation7 + $0x4] sm:$0xf]
    %v149 = vld [vmem:[#allocation7 + $0x8] sm:$0xf]
    %v150 = vld [vmem:[#allocation7 + $0xc] sm:$0xf]
    %v151 = vld [vmem:[#allocation7 + $0x10] sm:$0xf]
    %v152 = vld [vmem:[#allocation7 + $0x14] sm:$0xf]
    %v153 = vld [vmem:[#allocation7 + $0x18] sm:$0xf]
    %v154 = vld [vmem:[#allocation7 + $0x1c] sm:$0xf]
    %v155 = vld [vmem:[#allocation7 + $0x20] sm:$0xf]
    %v156 = vld [vmem:[#allocation7 + $0x24] sm:$0xf]
    %v157 = vld [vmem:[#allocation7 + $0x28] sm:$0xf]
    %v158 = vld [vmem:[#allocation7 + $0x2c] sm:$0xf]
    %v159 = vld [vmem:[#allocation7 + $0x30] sm:$0xf]
    %v160 = vld [vmem:[#allocation7 + $0x34] sm:$0xf]
    %v161 = vld [vmem:[#allocation7 + $0x38] sm:$0xf]
    %v162 = vld [vmem:[#allocation7 + $0x3c] sm:$0xf]
    %v163 = vld [vmem:[#allocation7 + $0x40] sm:$0xf]
    %v164 = vld [vmem:[#allocation7 + $0x44] sm:$0xf]
    %v165 = vld [vmem:[#allocation7 + $0x48] sm:$0xf]
    %v166 = vld [vmem:[#allocation7 + $0x4c] sm:$0xf]
    %v167 = vld [vmem:[#allocation7 + $0x50] sm:$0xf]
    %v168 = vld [vmem:[#allocation7 + $0x54] sm:$0xf]
    %v169 = vld [vmem:[#allocation7 + $0x58] sm:$0xf]
    %v170 = vld [vmem:[#allocation7 + $0x5c] sm:$0xf]
    %v171 = vld [vmem:[#allocation7 + $0x60] sm:$0xf]
    %v172 = vld [vmem:[#allocation7 + $0x64] sm:$0xf]
    %v173 = vld [vmem:[#allocation7 + $0x68] sm:$0xf]
    %v174 = vld [vmem:[#allocation7 + $0x6c] sm:$0xf]
    %v175 = vld [vmem:[#allocation7 + $0x70] sm:$0xf]
    %v176 = vld [vmem:[#allocation7 + $0x74] sm:$0xf]
    %v177 = vld [vmem:[#allocation7 + $0x78] sm:$0xf]
    %v178 = vld [vmem:[#allocation7 + $0x7c] sm:$0xf]
    %v179 = vld [vmem:[#allocation7 + $0x80] sm:$0xf]
    %v180 = vld [vmem:[#allocation7 + $0x84] sm:$0xf]
    %v181 = vld [vmem:[#allocation7 + $0x88] sm:$0xf]
    %v182 = vld [vmem:[#allocation7 + $0x8c] sm:$0xf]
    %v183 = vld [vmem:[#allocation7 + $0x90] sm:$0xf]
    %v184 = vld [vmem:[#allocation7 + $0x94] sm:$0xf]
    %v185 = vld [vmem:[#allocation7 + $0x98] sm:$0xf]
    %v186 = vld [vmem:[#allocation7 + $0x9c] sm:$0xf]
    %v187 = vld [vmem:[#allocation7 + $0xa0] sm:$0xf]
    %v188 = vld [vmem:[#allocation7 + $0xa4] sm:$0xf]
    %v189 = vld [vmem:[#allocation7 + $0xa8] sm:$0xf]
    %v190 = vld [vmem:[#allocation7 + $0xac] sm:$0xf]
    %v191 = vld [vmem:[#allocation7 + $0xb0] sm:$0xf]
    %v192 = vld [vmem:[#allocation7 + $0xb4] sm:$0xf]
    %v193 = vld [vmem:[#allocation7 + $0xb8] sm:$0xf]
    %v194 = vld [vmem:[#allocation7 + $0xbc] sm:$0xf]
    %v195 = vld [vmem:[#allocation7 + $0xc0] sm:$0xf]
    %v196 = vld [vmem:[#allocation7 + $0xc4] sm:$0xf]
    %v197 = vld [vmem:[#allocation7 + $0xc8] sm:$0xf]
    %v198 = vld [vmem:[#allocation7 + $0xcc] sm:$0xf]
    %v199 = vld [vmem:[#allocation7 + $0xd0] sm:$0xf]
    %v200 = vld [vmem:[#allocation7 + $0xd4] sm:$0xf]
    %v201 = vld [vmem:[#allocation7 + $0xd8] sm:$0xf]
    %v202 = vld [vmem:[#allocation7 + $0xdc] sm:$0xf]
    %v203 = vld [vmem:[#allocation7 + $0xe0] sm:$0xf]
    %v204 = vld [vmem:[#allocation7 + $0xe4] sm:$0xf]
    %v205 = vld [vmem:[#allocation7 + $0xe8] sm:$0xf]
    %v206 = vld [vmem:[#allocation7 + $0xec] sm:$0xf]
    %v207 = vld [vmem:[#allocation7 + $0xf0] sm:$0xf]
    %v208 = vld [vmem:[#allocation7 + $0xf4] sm:$0xf]
    %v209 = vld [vmem:[#allocation7 + $0xf8] sm:$0x3]
    %v210 = vld [vmem:[%s3] sm:$0x1]
    %v212 = vlaneseq
    %v213 = vshrl.u32 %v212, 7
    %v214 = vsub.s32 0, %v213
    %v215 = vrot.slane %v210, %v214
    %v280 = vunpack.c.l.b16 %v147
    %v281 = vunpack.c.l.b16 %v148
    %v282 = vunpack.c.l.b16 %v149
    %v283 = vunpack.c.l.b16 %v150
    %v284 = vunpack.c.l.b16 %v151
    %v285 = vunpack.c.l.b16 %v152
    %v286 = vunpack.c.l.b16 %v153
    %v287 = vunpack.c.l.b16 %v154
    %v288 = vunpack.c.l.b16 %v155
    %v289 = vunpack.c.l.b16 %v156
    %v290 = vunpack.c.l.b16 %v157
    %v291 = vunpack.c.l.b16 %v158
    %v292 = vunpack.c.l.b16 %v159
    %v293 = vunpack.c.l.b16 %v160
    %v294 = vunpack.c.l.b16 %v161
    %v295 = vunpack.c.l.b16 %v162
    %v296 = vunpack.c.l.b16 %v163
    %v297 = vunpack.c.l.b16 %v164
    %v298 = vunpack.c.l.b16 %v165
    %v299 = vunpack.c.l.b16 %v166
    %v300 = vunpack.c.l.b16 %v167
    %v301 = vunpack.c.l.b16 %v168
    %v302 = vunpack.c.l.b16 %v169
    %v303 = vunpack.c.l.b16 %v170
    %v304 = vunpack.c.l.b16 %v171
    %v305 = vunpack.c.l.b16 %v172
    %v306 = vunpack.c.l.b16 %v173
    %v307 = vunpack.c.l.b16 %v174
    %v308 = vunpack.c.l.b16 %v175
    %v309 = vunpack.c.l.b16 %v176
    %v310 = vunpack.c.l.b16 %v177
    %v311 = vunpack.c.l.b16 %v178
    %v312 = vunpack.c.l.b16 %v179
    %v313 = vunpack.c.l.b16 %v180
    %v314 = vunpack.c.l.b16 %v181
    %v315 = vunpack.c.l.b16 %v182
    %v316 = vunpack.c.l.b16 %v183
    %v317 = vunpack.c.l.b16 %v184
    %v318 = vunpack.c.l.b16 %v185
    %v319 = vunpack.c.l.b16 %v186
    %v320 = vunpack.c.l.b16 %v187
    %v321 = vunpack.c.l.b16 %v188
    %v322 = vunpack.c.l.b16 %v189
    %v323 = vunpack.c.l.b16 %v190
    %v324 = vunpack.c.l.b16 %v191
    %v325 = vunpack.c.l.b16 %v192
    %v326 = vunpack.c.l.b16 %v193
    %v327 = vunpack.c.l.b16 %v194
    %v328 = vunpack.c.l.b16 %v195
    %v329 = vunpack.c.l.b16 %v196
    %v330 = vunpack.c.l.b16 %v197
    %v331 = vunpack.c.l.b16 %v198
    %v332 = vunpack.c.l.b16 %v199
    %v333 = vunpack.c.l.b16 %v200
    %v334 = vunpack.c.l.b16 %v201
    %v335 = vunpack.c.l.b16 %v202
    %v336 = vunpack.c.l.b16 %v203
    %v337 = vunpack.c.l.b16 %v204
    %v338 = vunpack.c.l.b16 %v205
    %v339 = vunpack.c.l.b16 %v206
    %v340 = vunpack.c.l.b16 %v207
    %v341 = vunpack.c.l.b16 %v208
    %v342 = vunpack.c.l.b16 %v209
    %v343 = vpack.c.b16 %v281, %v280
    %v344 = vpack.c.b16 %v283, %v282
    %v345 = vpack.c.b16 %v285, %v284
    %v346 = vpack.c.b16 %v287, %v286
    %v347 = vpack.c.b16 %v289, %v288
    %v348 = vpack.c.b16 %v291, %v290
    %v349 = vpack.c.b16 %v293, %v292
    %v350 = vpack.c.b16 %v295, %v294
    %v351 = vpack.c.b16 %v297, %v296
    %v352 = vpack.c.b16 %v299, %v298
    %v353 = vpack.c.b16 %v301, %v300
    %v354 = vpack.c.b16 %v303, %v302
    %v355 = vpack.c.b16 %v305, %v304
    %v356 = vpack.c.b16 %v307, %v306
    %v357 = vpack.c.b16 %v309, %v308
    %v358 = vpack.c.b16 %v311, %v310
    %v359 = vpack.c.b16 %v313, %v312
    %v360 = vpack.c.b16 %v315, %v314
    %v361 = vpack.c.b16 %v317, %v316
    %v362 = vpack.c.b16 %v319, %v318
    %v363 = vpack.c.b16 %v321, %v320
    %v364 = vpack.c.b16 %v323, %v322
    %v365 = vpack.c.b16 %v325, %v324
    %v366 = vpack.c.b16 %v327, %v326
    %v367 = vpack.c.b16 %v329, %v328
    %v368 = vpack.c.b16 %v331, %v330
    %v369 = vpack.c.b16 %v333, %v332
    %v370 = vpack.c.b16 %v335, %v334
    %v371 = vpack.c.b16 %v337, %v336
    %v372 = vpack.c.b16 %v339, %v338
    %v373 = vpack.c.b16 %v341, %v340
    %v374 = vpack.c.b16 %v342, %v342
    %vm406 = vcmask 949248
    %v408 = vsel %vm406, %v146, 0
    %vm410 = vcmask 1041408
    %v412 = vsel %vm410, %v374, 0
    %414 = vmatprep.subr.bf16.mxu0 0
    %415 = vmatpush1.bf16.msra.mxu0 %v343
    %416 = vmatprep.subr.bf16.mxu0 0
    %417 = vmatpush1.bf16.msra.mxu0 %v344
    %418 = vmatprep.subr.bf16.mxu0 0
    %419 = vmatpush1.bf16.msra.mxu0 %v345
    %420 = vmatprep.subr.bf16.mxu0 0
    %421 = vmatpush1.bf16.msra.mxu0 %v346
    %422 = vmatprep.subr.bf16.mxu0 0
    %423 = vmatpush1.bf16.msra.mxu0 %v347
    %424 = vmatprep.subr.bf16.mxu0 0
    %425 = vmatpush1.bf16.msra.mxu0 %v348
    %426 = vmatprep.subr.bf16.mxu0 0
    %427 = vmatpush1.bf16.msra.mxu0 %v349
    %428 = vmatprep.subr.bf16.mxu0 0
    %429 = vmatpush1.bf16.msra.mxu0 %v350
    %430 = vmatprep.subr.bf16.mxu0 0
    %431 = vmatpush1.bf16.msra.mxu0 %v351
    %432 = vmatprep.subr.bf16.mxu0 0
    %433 = vmatpush1.bf16.msra.mxu0 %v352
    %434 = vmatprep.subr.bf16.mxu0 0
    %435 = vmatpush1.bf16.msra.mxu0 %v353
    %436 = vmatprep.subr.bf16.mxu0 0
    %437 = vmatpush1.bf16.msra.mxu0 %v354
    %438 = vmatprep.subr.bf16.mxu0 0
    %439 = vmatpush1.bf16.msra.mxu0 %v355
    %440 = vmatprep.subr.bf16.mxu0 0
    %441 = vmatpush1.bf16.msra.mxu0 %v356
    %442 = vmatprep.subr.bf16.mxu0 0
    %443 = vmatpush1.bf16.msra.mxu0 %v357
    %444 = vmatprep.subr.bf16.mxu0 0
    %445 = vmatpush1.bf16.msra.mxu0 %v358
    %446 = vmatprep.mubr.bf16.mxu0 %v144
    %447 = vmatmul.mubr.bf16.gmra.mrb[0].mxu0 %v143
    %v448 = vpop.f32.mrb[0].mxu0
    %v449 = vadd.f32 %v215, %v448
    %v450 = vpop.f32.mrb[0].mxu0
    %v451 = vpop.f32.mrb[0].mxu0
    %v452 = vpop.f32.mrb[0].mxu0
    %453 = vdwg.mxu0
    %454 = vmatprep.subr.bf16.mxu0 0
    %455 = vmatpush1.bf16.msra.mxu0 %v359
    %456 = vmatprep.subr.bf16.mxu0 0
    %457 = vmatpush1.bf16.msra.mxu0 %v360
    %458 = vmatprep.subr.bf16.mxu0 0
    %459 = vmatpush1.bf16.msra.mxu0 %v361
    %460 = vmatprep.subr.bf16.mxu0 0
    %461 = vmatpush1.bf16.msra.mxu0 %v362
    %462 = vmatprep.subr.bf16.mxu0 0
    %463 = vmatpush1.bf16.msra.mxu0 %v363
    %464 = vmatprep.subr.bf16.mxu0 0
    %465 = vmatpush1.bf16.msra.mxu0 %v364
    %466 = vmatprep.subr.bf16.mxu0 0
    %467 = vmatpush1.bf16.msra.mxu0 %v365
    %468 = vmatprep.subr.bf16.mxu0 0
    %469 = vmatpush1.bf16.msra.mxu0 %v366
    %470 = vmatprep.subr.bf16.mxu0 0
    %471 = vmatpush1.bf16.msra.mxu0 %v367
    %472 = vmatprep.subr.bf16.mxu0 0
    %473 = vmatpush1.bf16.msra.mxu0 %v368
    %474 = vmatprep.subr.bf16.mxu0 0
    %475 = vmatpush1.bf16.msra.mxu0 %v369
    %476 = vmatprep.subr.bf16.mxu0 0
    %477 = vmatpush1.bf16.msra.mxu0 %v370
    %478 = vmatprep.subr.bf16.mxu0 0
    %479 = vmatpush1.bf16.msra.mxu0 %v371
    %480 = vmatprep.subr.bf16.mxu0 0
    %481 = vmatpush1.bf16.msra.mxu0 %v372
    %482 = vmatprep.subr.bf16.mxu0 0
    %483 = vmatpush1.bf16.msra.mxu0 %v373
    %484 = vmatprep.subr.bf16.mxu0 0
    %485 = vmatpush1.bf16.msra.mxu0 %v412
    %486 = vmatprep.mubr.bf16.mxu0 %v408
    %487 = vmatmul.mubr.bf16.gmra.mrb[0].mxu0 %v145
    %v488 = vpop.f32.mrb[0].mxu0
    %v489 = vadd.f32 %v449, %v488
    %v490 = vpop.f32.mrb[0].mxu0
    %v491 = vpop.f32.mrb[0].mxu0
    %v492 = vpop.f32.mrb[0].mxu0
    %493 = vdwg.mxu0
    %v494 = vpack.c.bf16 %v489, %v489
    %v495 = vmax.bf16 %v494, 0
    %v496 = vmul.bf16 %v495, 1073758208
    %vm497 = vmpackc.low %vm132, %vm132
    %v498 = vsel %vm497, %v496, 0
    %v499 = vld [vmem:[#allocation9] sm:$0xff]
    %v500 = vld [vmem:[#allocation9 + $0x8] sm:$0xff]
    %v501 = vld [vmem:[#allocation9 + $0x10] sm:$0xff]
    %v502 = vld [vmem:[#allocation9 + $0x18] sm:$0xff]
    %v503 = vld [vmem:[#allocation9 + $0x20] sm:$0xff]
    %v504 = vld [vmem:[#allocation9 + $0x28] sm:$0xff]
    %v505 = vld [vmem:[#allocation9 + $0x30] sm:$0xff]
    %v506 = vld [vmem:[#allocation9 + $0x38] sm:$0xff]
    %v507 = vld [vmem:[#allocation9 + $0x40] sm:$0xff]
    %v508 = vld [vmem:[#allocation9 + $0x48] sm:$0xff]
    %v509 = vld [vmem:[#allocation9 + $0x50] sm:$0xff]
    %v510 = vld [vmem:[#allocation9 + $0x58] sm:$0xff]
    %v511 = vld [vmem:[#allocation9 + $0x60] sm:$0xff]
    %v512 = vld [vmem:[#allocation9 + $0x68] sm:$0xff]
    %v513 = vld [vmem:[#allocation9 + $0x70] sm:$0xff]
    %v514 = vld [vmem:[#allocation9 + $0x78] sm:$0xff]
    %v515 = vld [vmem:[%s5] sm:$0x3]
    %v517 = vlaneseq
    %v518 = vshrl.u32 %v517, 7
    %v519 = vsub.s32 0, %v518
    %v520 = vrot.slane %v515, %v519
    %v521 = vlaneseq
    %v522 = vshrl.u32 %v521, 7
    %v523 = vsub.s32 1, %v522
    %v524 = vrot.slane %v515, %v523
    %v543 = vunpack.c.l.b16 %v499
    %v544 = vunpack.c.h.b16 %v499
    %v545 = vunpack.c.l.b16 %v500
    %v546 = vunpack.c.h.b16 %v500
    %v547 = vunpack.c.l.b16 %v501
    %v548 = vunpack.c.h.b16 %v501
    %v549 = vunpack.c.l.b16 %v502
    %v550 = vunpack.c.h.b16 %v502
    %v551 = vunpack.c.l.b16 %v503
    %v552 = vunpack.c.h.b16 %v503
    %v553 = vunpack.c.l.b16 %v504
    %v554 = vunpack.c.h.b16 %v504
    %v555 = vunpack.c.l.b16 %v505
    %v556 = vunpack.c.h.b16 %v505
    %v557 = vunpack.c.l.b16 %v506
    %v558 = vunpack.c.h.b16 %v506
    %v559 = vunpack.c.l.b16 %v507
    %v560 = vunpack.c.h.b16 %v507
    %v561 = vunpack.c.l.b16 %v508
    %v562 = vunpack.c.h.b16 %v508
    %v563 = vunpack.c.l.b16 %v509
    %v564 = vunpack.c.h.b16 %v509
    %v565 = vunpack.c.l.b16 %v510
    %v566 = vunpack.c.h.b16 %v510
    %v567 = vunpack.c.l.b16 %v511
    %v568 = vunpack.c.h.b16 %v511
    %v569 = vunpack.c.l.b16 %v512
    %v570 = vunpack.c.h.b16 %v512
    %v571 = vunpack.c.l.b16 %v513
    %v572 = vunpack.c.h.b16 %v513
    %v573 = vunpack.c.l.b16 %v514
    %v574 = vunpack.c.h.b16 %v514
    %v575 = vpack.c.b16 %v545, %v543
    %v576 = vpack.c.b16 %v546, %v544
    %v577 = vpack.c.b16 %v549, %v547
    %v578 = vpack.c.b16 %v550, %v548
    %v579 = vpack.c.b16 %v553, %v551
    %v580 = vpack.c.b16 %v554, %v552
    %v581 = vpack.c.b16 %v557, %v555
    %v582 = vpack.c.b16 %v558, %v556
    %v583 = vpack.c.b16 %v561, %v559
    %v584 = vpack.c.b16 %v562, %v560
    %v585 = vpack.c.b16 %v565, %v563
    %v586 = vpack.c.b16 %v566, %v564
    %v587 = vpack.c.b16 %v569, %v567
    %v588 = vpack.c.b16 %v570, %v568
    %v589 = vpack.c.b16 %v573, %v571
    %v590 = vpack.c.b16 %v574, %v572
    %607 = vmatprep.subr.bf16.mxu0 %v576
    %608 = vmatpush1.bf16.msra.mxu0 %v575
    %609 = vmatprep.subr.bf16.mxu0 %v578
    %610 = vmatpush1.bf16.msra.mxu0 %v577
    %611 = vmatprep.subr.bf16.mxu0 %v580
    %612 = vmatpush1.bf16.msra.mxu0 %v579
    %613 = vmatprep.subr.bf16.mxu0 %v582
    %614 = vmatpush1.bf16.msra.mxu0 %v581
    %615 = vmatprep.subr.bf16.mxu0 %v584
    %616 = vmatpush1.bf16.msra.mxu0 %v583
    %617 = vmatprep.subr.bf16.mxu0 %v586
    %618 = vmatpush1.bf16.msra.mxu0 %v585
    %619 = vmatprep.subr.bf16.mxu0 %v588
    %620 = vmatpush1.bf16.msra.mxu0 %v587
    %621 = vmatprep.subr.bf16.mxu0 %v590
    %622 = vmatpush1.bf16.msra.mxu0 %v589
    %623 = vmatprep.subr.bf16.mxu0 0
    %624 = vmatpush1.bf16.msra.mxu0 0
    %625 = vmatprep.subr.bf16.mxu0 0
    %626 = vmatpush1.bf16.msra.mxu0 0
    %627 = vmatprep.subr.bf16.mxu0 0
    %628 = vmatpush1.bf16.msra.mxu0 0
    %629 = vmatprep.subr.bf16.mxu0 0
    %630 = vmatpush1.bf16.msra.mxu0 0
    %631 = vmatprep.subr.bf16.mxu0 0
    %632 = vmatpush1.bf16.msra.mxu0 0
    %633 = vmatprep.subr.bf16.mxu0 0
    %634 = vmatpush1.bf16.msra.mxu0 0
    %635 = vmatprep.subr.bf16.mxu0 0
    %636 = vmatpush1.bf16.msra.mxu0 0
    %637 = vmatprep.subr.bf16.mxu0 0
    %638 = vmatpush1.bf16.msra.mxu0 0
    %639 = vmatprep.mubr.bf16.mxu0 0
    %640 = vmatmul.mubr.bf16.gmra.mrb[0].mxu0 %v498
    %v641 = vpop.f32.mrb[0].mxu0
    %v642 = vadd.f32 %v520, %v641
    %v643 = vpop.f32.mrb[0].mxu0
    %v644 = vadd.f32 %v524, %v643
    %v645 = vpop.f32.mrb[0].mxu0
    %v646 = vpop.f32.mrb[0].mxu0
    %647 = vdwg.mxu0
    %v648 = vpack.c.bf16 %v642, %v642
    %v649 = vpack.c.bf16 %v644, %v644
    %v650 = vmax.bf16 %v648, 0
    %v651 = vmax.bf16 %v649, 0
    %v652 = vmul.bf16 %v650, 1073758208
    %v653 = vmul.bf16 %v651, 1073758208
    %vm654 = vmpackc.low %vm135, %vm135
    %vm655 = vmpackc.low %vm136, %vm136
    %v656 = vsel %vm654, %v652, 0
    %v657 = vsel %vm655, %v653, 0
    %v658 = vld [vmem:[#allocation10] sm:$0xf]
    %v659 = vld [vmem:[#allocation10 + $0x4] sm:$0xf]
    %v660 = vld [vmem:[#allocation10 + $0x8] sm:$0xf]
    %v661 = vld [vmem:[#allocation10 + $0xc] sm:$0xf]
    %v662 = vld [vmem:[#allocation10 + $0x10] sm:$0xf]
    %v663 = vld [vmem:[#allocation10 + $0x14] sm:$0xf]
    %v664 = vld [vmem:[#allocation10 + $0x18] sm:$0xf]
    %v665 = vld [vmem:[#allocation10 + $0x1c] sm:$0xf]
    %v666 = vld [vmem:[#allocation10 + $0x20] sm:$0xf]
    %v667 = vld [vmem:[#allocation10 + $0x24] sm:$0xf]
    %v668 = vld [vmem:[#allocation10 + $0x28] sm:$0xf]
    %v669 = vld [vmem:[#allocation10 + $0x2c] sm:$0xf]
    %v670 = vld [vmem:[#allocation10 + $0x30] sm:$0xf]
    %v671 = vld [vmem:[#allocation10 + $0x34] sm:$0xf]
    %v672 = vld [vmem:[#allocation10 + $0x38] sm:$0xf]
    %v673 = vld [vmem:[#allocation10 + $0x3c] sm:$0xf]
    %v674 = vld [vmem:[#allocation10 + $0x40] sm:$0xf]
    %v675 = vld [vmem:[#allocation10 + $0x44] sm:$0xf]
    %v676 = vld [vmem:[#allocation10 + $0x48] sm:$0xf]
    %v677 = vld [vmem:[#allocation10 + $0x4c] sm:$0xf]
    %v678 = vld [vmem:[#allocation10 + $0x50] sm:$0xf]
    %v679 = vld [vmem:[#allocation10 + $0x54] sm:$0xf]
    %v680 = vld [vmem:[#allocation10 + $0x58] sm:$0xf]
    %v681 = vld [vmem:[#allocation10 + $0x5c] sm:$0xf]
    %v682 = vld [vmem:[#allocation10 + $0x60] sm:$0xf]
    %v683 = vld [vmem:[#allocation10 + $0x64] sm:$0xf]
    %v684 = vld [vmem:[#allocation10 + $0x68] sm:$0xf]
    %v685 = vld [vmem:[#allocation10 + $0x6c] sm:$0xf]
    %v686 = vld [vmem:[#allocation10 + $0x70] sm:$0xf]
    %v687 = vld [vmem:[#allocation10 + $0x74] sm:$0xf]
    %v688 = vld [vmem:[#allocation10 + $0x78] sm:$0xf]
    %v689 = vld [vmem:[#allocation10 + $0x7c] sm:$0xf]
    %v690 = vld [vmem:[%s7] sm:$0x1]
    %v692 = vlaneseq
    %v693 = vshrl.u32 %v692, 7
    %v694 = vsub.s32 0, %v693
    %v695 = vrot.slane %v690, %v694
    %v729 = vunpack.c.l.b16 %v658
    %v730 = vunpack.c.l.b16 %v659
    %v731 = vunpack.c.l.b16 %v660
    %v732 = vunpack.c.l.b16 %v661
    %v733 = vunpack.c.l.b16 %v662
    %v734 = vunpack.c.l.b16 %v663
    %v735 = vunpack.c.l.b16 %v664
    %v736 = vunpack.c.l.b16 %v665
    %v737 = vunpack.c.l.b16 %v666
    %v738 = vunpack.c.l.b16 %v667
    %v739 = vunpack.c.l.b16 %v668
    %v740 = vunpack.c.l.b16 %v669
    %v741 = vunpack.c.l.b16 %v670
    %v742 = vunpack.c.l.b16 %v671
    %v743 = vunpack.c.l.b16 %v672
    %v744 = vunpack.c.l.b16 %v673
    %v745 = vunpack.c.l.b16 %v674
    %v746 = vunpack.c.l.b16 %v675
    %v747 = vunpack.c.l.b16 %v676
    %v748 = vunpack.c.l.b16 %v677
    %v749 = vunpack.c.l.b16 %v678
    %v750 = vunpack.c.l.b16 %v679
    %v751 = vunpack.c.l.b16 %v680
    %v752 = vunpack.c.l.b16 %v681
    %v753 = vunpack.c.l.b16 %v682
    %v754 = vunpack.c.l.b16 %v683
    %v755 = vunpack.c.l.b16 %v684
    %v756 = vunpack.c.l.b16 %v685
    %v757 = vunpack.c.l.b16 %v686
    %v758 = vunpack.c.l.b16 %v687
    %v759 = vunpack.c.l.b16 %v688
    %v760 = vunpack.c.l.b16 %v689
    %v761 = vpack.c.b16 %v730, %v729
    %v762 = vpack.c.b16 %v732, %v731
    %v763 = vpack.c.b16 %v734, %v733
    %v764 = vpack.c.b16 %v736, %v735
    %v765 = vpack.c.b16 %v738, %v737
    %v766 = vpack.c.b16 %v740, %v739
    %v767 = vpack.c.b16 %v742, %v741
    %v768 = vpack.c.b16 %v744, %v743
    %v769 = vpack.c.b16 %v746, %v745
    %v770 = vpack.c.b16 %v748, %v747
    %v771 = vpack.c.b16 %v750, %v749
    %v772 = vpack.c.b16 %v752, %v751
    %v773 = vpack.c.b16 %v754, %v753
    %v774 = vpack.c.b16 %v756, %v755
    %v775 = vpack.c.b16 %v758, %v757
    %v776 = vpack.c.b16 %v760, %v759
    %793 = vmatprep.subr.bf16.mxu0 0
    %794 = vmatpush1.bf16.msra.mxu0 %v761
    %795 = vmatprep.subr.bf16.mxu0 0
    %796 = vmatpush1.bf16.msra.mxu0 %v762
    %797 = vmatprep.subr.bf16.mxu0 0
    %798 = vmatpush1.bf16.msra.mxu0 %v763
    %799 = vmatprep.subr.bf16.mxu0 0
    %800 = vmatpush1.bf16.msra.mxu0 %v764
    %801 = vmatprep.subr.bf16.mxu0 0
    %802 = vmatpush1.bf16.msra.mxu0 %v765
    %803 = vmatprep.subr.bf16.mxu0 0
    %804 = vmatpush1.bf16.msra.mxu0 %v766
    %805 = vmatprep.subr.bf16.mxu0 0
    %806 = vmatpush1.bf16.msra.mxu0 %v767
    %807 = vmatprep.subr.bf16.mxu0 0
    %808 = vmatpush1.bf16.msra.mxu0 %v768
    %809 = vmatprep.subr.bf16.mxu0 0
    %810 = vmatpush1.bf16.msra.mxu0 %v769
    %811 = vmatprep.subr.bf16.mxu0 0
    %812 = vmatpush1.bf16.msra.mxu0 %v770
    %813 = vmatprep.subr.bf16.mxu0 0
    %814 = vmatpush1.bf16.msra.mxu0 %v771
    %815 = vmatprep.subr.bf16.mxu0 0
    %816 = vmatpush1.bf16.msra.mxu0 %v772
    %817 = vmatprep.subr.bf16.mxu0 0
    %818 = vmatpush1.bf16.msra.mxu0 %v773
    %819 = vmatprep.subr.bf16.mxu0 0
    %820 = vmatpush1.bf16.msra.mxu0 %v774
    %821 = vmatprep.subr.bf16.mxu0 0
    %822 = vmatpush1.bf16.msra.mxu0 %v775
    %823 = vmatprep.subr.bf16.mxu0 0
    %824 = vmatpush1.bf16.msra.mxu0 %v776
    %825 = vmatprep.mubr.bf16.mxu0 %v657
    %826 = vmatmul.mubr.bf16.gmra.mrb[0].mxu0 %v656
    %v827 = vpop.f32.mrb[0].mxu0
    %v828 = vadd.f32 %v695, %v827
    %v829 = vpop.f32.mrb[0].mxu0
    %v830 = vpop.f32.mrb[0].mxu0
    %v831 = vpop.f32.mrb[0].mxu0
    %832 = vdwg.mxu0
    %v833 = vpack.c.bf16 %v828, %v828
    %v834 = vmax.bf16 %v833, 0
    %v835 = vmul.bf16 %v834, 1073758208
    %vm836 = vmpackc.low %vm138, %vm138
    %v837 = vsel %vm836, %v835, 0
    %v838 = vld [vmem:[#allocation12] sm:$0xf]
    %v839 = vld [vmem:[#allocation12 + $0x4] sm:$0xf]
    %v840 = vld [vmem:[#allocation12 + $0x8] sm:$0xf]
    %v841 = vld [vmem:[#allocation12 + $0xc] sm:$0xf]
    %v842 = vld [vmem:[#allocation12 + $0x10] sm:$0xf]
    %v843 = vld [vmem:[#allocation12 + $0x14] sm:$0xf]
    %v844 = vld [vmem:[#allocation12 + $0x18] sm:$0xf]
    %v845 = vld [vmem:[#allocation12 + $0x1c] sm:$0xf]
    %v846 = vld [vmem:[#allocation12 + $0x20] sm:$0xf]
    %v847 = vld [vmem:[#allocation12 + $0x24] sm:$0xf]
    %v848 = vld [vmem:[#allocation12 + $0x28] sm:$0xf]
    %v849 = vld [vmem:[#allocation12 + $0x2c] sm:$0xf]
    %v850 = vld [vmem:[#allocation12 + $0x30] sm:$0xf]
    %v851 = vld [vmem:[#allocation12 + $0x34] sm:$0xf]
    %v852 = vld [vmem:[#allocation12 + $0x38] sm:$0xf]
    %v853 = vld [vmem:[#allocation12 + $0x3c] sm:$0xf]
    %v854 = vld [vmem:[%s9] sm:$0x1]
    %v856 = vlaneseq
    %v857 = vshrl.u32 %v856, 7
    %v858 = vsub.s32 0, %v857
    %v859 = vrot.slane %v854, %v858
    %v877 = vunpack.c.l.b16 %v838
    %v878 = vunpack.c.l.b16 %v839
    %v879 = vunpack.c.l.b16 %v840
    %v880 = vunpack.c.l.b16 %v841
    %v881 = vunpack.c.l.b16 %v842
    %v882 = vunpack.c.l.b16 %v843
    %v883 = vunpack.c.l.b16 %v844
    %v884 = vunpack.c.l.b16 %v845
    %v885 = vunpack.c.l.b16 %v846
    %v886 = vunpack.c.l.b16 %v847
    %v887 = vunpack.c.l.b16 %v848
    %v888 = vunpack.c.l.b16 %v849
    %v889 = vunpack.c.l.b16 %v850
    %v890 = vunpack.c.l.b16 %v851
    %v891 = vunpack.c.l.b16 %v852
    %v892 = vunpack.c.l.b16 %v853
    %v893 = vpack.c.b16 %v878, %v877
    %v894 = vpack.c.b16 %v880, %v879
    %v895 = vpack.c.b16 %v882, %v881
    %v896 = vpack.c.b16 %v884, %v883
    %v897 = vpack.c.b16 %v886, %v885
    %v898 = vpack.c.b16 %v888, %v887
    %v899 = vpack.c.b16 %v890, %v889
    %v900 = vpack.c.b16 %v892, %v891
    %909 = vmatprep.subr.bf16.mxu0 0
    %910 = vmatpush1.bf16.msra.mxu0 %v893
    %911 = vmatprep.subr.bf16.mxu0 0
    %912 = vmatpush1.bf16.msra.mxu0 %v894
    %913 = vmatprep.subr.bf16.mxu0 0
    %914 = vmatpush1.bf16.msra.mxu0 %v895
    %915 = vmatprep.subr.bf16.mxu0 0
    %916 = vmatpush1.bf16.msra.mxu0 %v896
    %917 = vmatprep.subr.bf16.mxu0 0
    %918 = vmatpush1.bf16.msra.mxu0 %v897
    %919 = vmatprep.subr.bf16.mxu0 0
    %920 = vmatpush1.bf16.msra.mxu0 %v898
    %921 = vmatprep.subr.bf16.mxu0 0
    %922 = vmatpush1.bf16.msra.mxu0 %v899
    %923 = vmatprep.subr.bf16.mxu0 0
    %924 = vmatpush1.bf16.msra.mxu0 %v900
    %925 = vmatprep.subr.bf16.mxu0 0
    %926 = vmatpush1.bf16.msra.mxu0 0
    %927 = vmatprep.subr.bf16.mxu0 0
    %928 = vmatpush1.bf16.msra.mxu0 0
    %929 = vmatprep.subr.bf16.mxu0 0
    %930 = vmatpush1.bf16.msra.mxu0 0
    %931 = vmatprep.subr.bf16.mxu0 0
    %932 = vmatpush1.bf16.msra.mxu0 0
    %933 = vmatprep.subr.bf16.mxu0 0
    %934 = vmatpush1.bf16.msra.mxu0 0
    %935 = vmatprep.subr.bf16.mxu0 0
    %936 = vmatpush1.bf16.msra.mxu0 0
    %937 = vmatprep.subr.bf16.mxu0 0
    %938 = vmatpush1.bf16.msra.mxu0 0
    %939 = vmatprep.subr.bf16.mxu0 0
    %940 = vmatpush1.bf16.msra.mxu0 0
    %941 = vmatprep.mubr.bf16.mxu0 0
    %942 = vmatmul.mubr.bf16.gmra.mrb[0].mxu0 %v837
    %v943 = vpop.f32.mrb[0].mxu0
    %v944 = vadd.f32 %v859, %v943
    %v945 = vpop.f32.mrb[0].mxu0
    %v946 = vpop.f32.mrb[0].mxu0
    %v947 = vpop.f32.mrb[0].mxu0
    %948 = vdwg.mxu0
    %949 = vst [vmem:[#allocation13] sm:$0xff] %v944
    // Predicated region
    $region58: #{tpu_custom_call.1} parent=1 // pred_check
      _
    $region59: #{tpu_custom_call.1} parent=1 // pred_check_branch
      %951 = sbr.rel (0) target = $region61
    $region60: #{tpu_custom_call.1} parent=1 // pred_region
      %s953 = ssub.s32 128, 128
      %954 = vsyncadd [#allocation6], %s953
      %s956 = sshll.u32 [#allocation13], 4
      %s957 = int_to_ptr.vmem [resolvable:$true] %s956
      %959 = dma.vmem_to_hbm [thread:$0]  %s957, 128, %s10, [#allocation6]
    $region61: #{tpu_custom_call.1} parent=1 // pred_fallthru
      _
    // Predicated region
    $region62: #{tpu_custom_call.1} parent=1 // pred_check
      _
    $region63: #{tpu_custom_call.1} parent=1 // pred_check_branch
      %961 = sbr.rel (0) target = $region65
    $region64: #{tpu_custom_call.1} parent=1 // pred_region
      %962 = dma.done [#allocation6], 128
    $region65: #{tpu_custom_call.1} parent=1 // pred_fallthru
      _
    %963 = vsyncpa [#allocation5], 1
    %964 = vsyncpa [#allocation8], 1
    %965 = vsyncpa [#allocation11], 1
    %966 = vsyncpa [#allocation6], 1

</llo_original>
